<compile_context>
chip_gen: v7x
topology: tpu7x:2x2x1
jax: 0.10.0
libtpu: 0.0.40
codegen_flags: <defaults>
</compile_context>

<pallas_src>
import jax
import jax.numpy as jnp
from jax.experimental import pallas as pl
from jax.experimental.pallas import tpu as pltpu

LANE = 128  # each gate block spans one full 128-lane vreg block (fwd|bwd|pad inside it)


def _round_up(n, m):
    return ((n + m - 1) // m) * m


def _bigru_kernel(x_ref, w3_ref, b3_ref, bhn_ref, wfc_ref, bfc_ref, out_ref):
    LP = LANE
    x = x_ref[...].astype(jnp.bfloat16)                                   # (TB, I)

    # One fused input projection: both directions + all 3 gates in 3 lane blocks.
    gi = (jnp.dot(x, w3_ref[...], preferred_element_type=jnp.float32)
          + b3_ref[...])                                                   # (TB, 3*128)

    pre_r = gi[:, 0:LP]            # lanes: [r_f(H) | r_b(H) | 0]   (128-aligned views)
    pre_z = gi[:, LP:2 * LP]       # lanes: [z_f    | z_b    | 0]
    gi_n = gi[:, 2 * LP:3 * LP]    # lanes: [n_f    | n_b    | 0]

    r = jax.nn.sigmoid(pre_r)
    one_minus_z = jax.nn.sigmoid(-pre_z)                 # 1 - sigmoid(pre_z)
    n = jnp.tanh(gi_n + r * bhn_ref[...])                # bhn lanes match n lanes
    h = one_minus_z * n                                  # (TB,128); pad lanes == 0

    # Single FC dot: fwd weights in rows 0..H-1, bwd in rows H..2H-1, pad rows zero.
    logits = (jnp.dot(h.astype(jnp.bfloat16), wfc_ref[...],
                      preferred_element_type=jnp.float32)
              + bfc_ref[...])                                              # (TB, OP)

    out_ref[...] = jax.nn.sigmoid(logits) * 44.0 + 1.0


def bigru_forward(x, packed, *, output_size, tile_b=None):
    """x: (B, I) float32. packed: dict from pack_params(). Returns (B, output_size)."""
    B, I = x.shape
    OP = packed["bfc"].shape[1]

    # Tiny sublane pad only (<= 7 rows); no large host-side copies of x.
    Bp = _round_up(B, 8)
    if Bp != B:
        x = jnp.pad(x, ((0, Bp - B), (0, 0)))

    if tile_b is None:
        # Big tiles to amortize per-step overhead, but keep >=2 grid steps for large
        # batches so v7x's two TensorCores can split the parallel batch axis.
        tile_b = max(8, min(2048, _round_up(pl.cdiv(Bp, 2), 8)))
    tile_b = min(tile_b, Bp)

    grid = (pl.cdiv(Bp, tile_b),)
    resident = lambda i: (0, 0)   # weights/biases: same block every step -> VMEM resident

    out = pl.pallas_call(
        _bigru_kernel,
        out_shape=jax.ShapeDtypeStruct((Bp, OP), jnp.float32),
        grid=grid,
        in_specs=[
            pl.BlockSpec((tile_b, I), lambda i: (i, 0)),       # x tile (pipelined)
            pl.BlockSpec(packed["w3"].shape, resident),        # (I, 3*128) bf16
            pl.BlockSpec(packed["b3"].shape, resident),        # (1, 3*128) f32
            pl.BlockSpec(packed["bhn"].shape, resident),       # (1, 128)   f32
            pl.BlockSpec(packed["wfc"].shape, resident),       # (128, OP)  bf16
            pl.BlockSpec(packed["bfc"].shape, resident),       # (1, OP)    f32
        ],
        out_specs=pl.BlockSpec((tile_b, OP), lambda i: (i, 0)),
        compiler_params=pltpu.CompilerParams(dimension_semantics=("parallel",)),
    )(x, packed["w3"], packed["b3"], packed["bhn"], packed["wfc"], packed["bfc"])

    return out[:B, :output_size]


def init_params(key, input_size, hidden_size, output_size):
    """Deterministic synthetic params in PyTorch layout (uniform(-1/sqrt(H), 1/sqrt(H)))."""
    H = hidden_size
    ks = jax.random.split(key, 8)
    s = 1.0 / jnp.sqrt(jnp.float32(H))
    u = lambda k, shape: jax.random.uniform(k, shape, jnp.float32, -s, s)
    return {
        # weight_hh is omitted: it multiplies h0 == 0 for seq_len == 1.
        "weight_ih_f": u(ks[0], (3 * H, input_size)),
        "bias_ih_f": u(ks[1], (3 * H,)),
        "bias_hh_f": u(ks[2], (3 * H,)),
        "weight_ih_b": u(ks[3], (3 * H, input_size)),
        "bias_ih_b": u(ks[4], (3 * H,)),
        "bias_hh_b": u(ks[5], (3 * H,)),
        "fc_weight": u(ks[6], (output_size, 2 * H)),
        "fc_bias": u(ks[7], (output_size,)),
    }


def pack_params(p, input_size, hidden_size, output_size):
    """Host-side repack: fwd/bwd share lanes inside each 128-lane gate block; biases
    folded (b_ih+b_hh for r/z, b_hh_n kept separate for the r* term); bf16 weights."""
    H, O = hidden_size, output_size
    LP = LANE
    OP = _round_up(O, 8)
    assert 2 * H <= LP, "hidden_size too large for shared-lane packing"

    def gate_block(g, fold_hh):
        blk_w = jnp.zeros((input_size, LP), jnp.float32)
        blk_b = jnp.zeros((LP,), jnp.float32)
        for d, (wih, bih, bhh) in enumerate(
                ((p["weight_ih_f"], p["bias_ih_f"], p["bias_hh_f"]),
                 (p["weight_ih_b"], p["bias_ih_b"], p["bias_hh_b"]))):
            w = wih[g * H:(g + 1) * H, :].T                  # (I, H)
            b = bih[g * H:(g + 1) * H]
            if fold_hh:
                b = b + bhh[g * H:(g + 1) * H]
            blk_w = blk_w.at[:, d * H:(d + 1) * H].set(w)
            blk_b = blk_b.at[d * H:(d + 1) * H].set(b)
        return blk_w, blk_b

    wr, br = gate_block(0, True)    # r: fold b_ih + b_hh
    wz, bz = gate_block(1, True)    # z: fold b_ih + b_hh
    wn, bn = gate_block(2, False)   # n: b_hh_n applied under r* in-kernel

    w3 = jnp.concatenate([wr, wz, wn], axis=1)               # (I, 3*128)
    b3 = jnp.concatenate([br, bz, bn])[None, :]              # (1, 3*128)

    bhn = jnp.zeros((1, LP), jnp.float32)
    bhn = bhn.at[0, :H].set(p["bias_hh_f"][2 * H:3 * H])
    bhn = bhn.at[0, H:2 * H].set(p["bias_hh_b"][2 * H:3 * H])

    wfc = jnp.zeros((LP, OP), jnp.float32)
    wfc = wfc.at[:H, :O].set(p["fc_weight"][:, :H].T)        # fwd rows
    wfc = wfc.at[H:2 * H, :O].set(p["fc_weight"][:, H:].T)   # bwd rows
    bfc = jnp.zeros((1, OP), jnp.float32).at[0, :O].set(p["fc_bias"])

    return {
        "w3": w3.astype(jnp.bfloat16),
        "b3": b3,
        "bhn": bhn,
        "wfc": wfc.astype(jnp.bfloat16),
        "bfc": bfc,
    }


def _reference(x, p, hidden_size):
    """Pure-JAX f32 reference mirroring the PyTorch forward."""
    H = hidden_size

    def step(wih, bih, bhh):
        gi = x @ wih.T + bih
        r = jax.nn.sigmoid(gi[:, :H] + bhh[:H])
        z = jax.nn.sigmoid(gi[:, H:2 * H] + bhh[H:2 * H])
        n = jnp.tanh(gi[:, 2 * H:] + r * bhh[2 * H:])
        return (1.0 - z) * n

    h = jnp.concatenate(
        [step(p["weight_ih_f"], p["bias_ih_f"], p["bias_hh_f"]),
         step(p["weight_ih_b"], p["bias_ih_b"], p["bias_hh_b"])], axis=-1)
    return jax.nn.sigmoid(h @ p["fc_weight"].T + p["fc_bias"]) * 44.0 + 1.0


if __name__ == "__main__":
    B, INPUT, HIDDEN, OUTPUT = 8, 16, 32, 4

    key = jax.random.PRNGKey(0)
    k_x, k_p = jax.random.split(key)
    x = jax.random.normal(k_x, (B, INPUT), jnp.float32)
    params = init_params(k_p, INPUT, HIDDEN, OUTPUT)
    packed = pack_params(params, INPUT, HIDDEN, OUTPUT)

    out = bigru_forward(x, packed, output_size=OUTPUT)
    out = jax.block_until_ready(out)

    ref = _reference(x, params, HIDDEN)
    assert out.shape == (B, OUTPUT)
    # bf16 MXU operands (f32 accumulation) -> loosened tolerance vs. pure-f32 reference.
    max_err = float(jnp.max(jnp.abs(out - ref)))
    assert jnp.allclose(out, ref, atol=2e-1, rtol=2e-2), max_err
    assert bool(jnp.all(out >= 1.0)) and bool(jnp.all(out <= 45.0))

    print("KERNEL_OK")
</pallas_src>

<mosaic_0001>
module attributes {stable_mosaic.version = 11 : i64} {
  func.func @_bigru_kernel(%arg0: i32, %arg1: memref<8x16xf32, #tpu.memory_space<vmem>>, %arg2: memref<16x384xbf16, #tpu.memory_space<vmem>>, %arg3: memref<1x384xf32, #tpu.memory_space<vmem>>, %arg4: memref<1x128xf32, #tpu.memory_space<vmem>>, %arg5: memref<128x8xbf16, #tpu.memory_space<vmem>>, %arg6: memref<1x8xf32, #tpu.memory_space<vmem>>, %arg7: memref<8x8xf32, #tpu.memory_space<vmem>>) attributes {dimension_semantics = [#tpu.dimension_semantics<parallel>], iteration_bounds = array<i64: 1>, scalar_prefetch = 0 : i64, scratch_operands = 0 : i64, tpu.core_type = #tpu.core_type<tc>, window_params = [{transform_indices = @transform_0, window_bounds = array<i64: 8, 16>}, {pipeline_mode = #tpu.pipeline_mode<synchronous>, transform_indices = @transform_1, window_bounds = array<i64: 16, 384>}, {pipeline_mode = #tpu.pipeline_mode<synchronous>, transform_indices = @transform_2, window_bounds = array<i64: 1, 384>}, {pipeline_mode = #tpu.pipeline_mode<synchronous>, transform_indices = @transform_3, window_bounds = array<i64: 1, 128>}, {pipeline_mode = #tpu.pipeline_mode<synchronous>, transform_indices = @transform_4, window_bounds = array<i64: 128, 8>}, {pipeline_mode = #tpu.pipeline_mode<synchronous>, transform_indices = @transform_5, window_bounds = array<i64: 1, 8>}, {transform_indices = @transform_6, window_bounds = array<i64: 8, 8>}]} {
    %c0 = arith.constant 0 : index
    %c0_0 = arith.constant 0 : index
    %0 = vector.load %arg1[%c0, %c0_0] : memref<8x16xf32, #tpu.memory_space<vmem>>, vector<8x16xf32>
    %1 = arith.truncf %0 : vector<8x16xf32> to vector<8x16xbf16>
    %c0_1 = arith.constant 0 : index
    %c0_2 = arith.constant 0 : index
    %2 = vector.load %arg2[%c0_1, %c0_2] : memref<16x384xbf16, #tpu.memory_space<vmem>>, vector<16x384xbf16>
    %cst = arith.constant dense<0.000000e+00> : vector<8x384xf32>
    %3 = tpu.matmul %1, %2, %cst {dimension_numbers = #tpu.dot_dimension_numbers<[1], [0], [0], [1], [0, 0, 1, 1], [], []>} : vector<8x16xbf16>, vector<16x384xbf16>, vector<8x384xf32> -> vector<8x384xf32>
    %c0_3 = arith.constant 0 : index
    %c0_4 = arith.constant 0 : index
    %4 = vector.load %arg3[%c0_3, %c0_4] : memref<1x384xf32, #tpu.memory_space<vmem>>, vector<1x384xf32>
    %5 = vector.broadcast %4 : vector<1x384xf32> to vector<8x384xf32>
    %6 = arith.addf %3, %5 : vector<8x384xf32>
    %7 = vector.extract_strided_slice %6 {offsets = [0, 0], sizes = [8, 128], strides = [1, 1]} : vector<8x384xf32> to vector<8x128xf32>
    %8 = vector.extract_strided_slice %6 {offsets = [0, 128], sizes = [8, 128], strides = [1, 1]} : vector<8x384xf32> to vector<8x128xf32>
    %9 = vector.extract_strided_slice %6 {offsets = [0, 256], sizes = [8, 128], strides = [1, 1]} : vector<8x384xf32> to vector<8x128xf32>
    %10 = arith.negf %7 : vector<8x128xf32>
    %11 = math.exp %10 : vector<8x128xf32>
    %cst_5 = arith.constant 1.000000e+00 : f32
    %12 = vector.broadcast %cst_5 : f32 to vector<8x128xf32>
    %13 = arith.addf %12, %11 : vector<8x128xf32>
    %14 = arith.divf %12, %13 : vector<8x128xf32>
    %cst_6 = arith.constant 0.000000e+00 : f32
    %15 = vector.broadcast %cst_6 : f32 to vector<8x128xf32>
    %16 = arith.subf %15, %8 : vector<8x128xf32>
    %17 = arith.negf %16 : vector<8x128xf32>
    %18 = math.exp %17 : vector<8x128xf32>
    %cst_7 = arith.constant 1.000000e+00 : f32
    %19 = vector.broadcast %cst_7 : f32 to vector<8x128xf32>
    %20 = arith.addf %19, %18 : vector<8x128xf32>
    %21 = arith.divf %19, %20 : vector<8x128xf32>
    %c0_8 = arith.constant 0 : index
    %c0_9 = arith.constant 0 : index
    %22 = vector.load %arg4[%c0_8, %c0_9] : memref<1x128xf32, #tpu.memory_space<vmem>>, vector<1x128xf32>
    %23 = vector.broadcast %22 : vector<1x128xf32> to vector<8x128xf32>
    %24 = arith.mulf %14, %23 : vector<8x128xf32>
    %25 = arith.addf %9, %24 : vector<8x128xf32>
    %26 = math.tanh %25 : vector<8x128xf32>
    %27 = arith.mulf %21, %26 : vector<8x128xf32>
    %28 = arith.truncf %27 : vector<8x128xf32> to vector<8x128xbf16>
    %c0_10 = arith.constant 0 : index
    %c0_11 = arith.constant 0 : index
    %29 = vector.load %arg5[%c0_10, %c0_11] : memref<128x8xbf16, #tpu.memory_space<vmem>>, vector<128x8xbf16>
    %cst_12 = arith.constant dense<0.000000e+00> : vector<8x8xf32>
    %30 = tpu.matmul %28, %29, %cst_12 {dimension_numbers = #tpu.dot_dimension_numbers<[1], [0], [0], [1], [0, 0, 1, 1], [], []>} : vector<8x128xbf16>, vector<128x8xbf16>, vector<8x8xf32> -> vector<8x8xf32>
    %c0_13 = arith.constant 0 : index
    %c0_14 = arith.constant 0 : index
    %31 = vector.load %arg6[%c0_13, %c0_14] : memref<1x8xf32, #tpu.memory_space<vmem>>, vector<1x8xf32>
    %32 = vector.broadcast %31 : vector<1x8xf32> to vector<8x8xf32>
    %33 = arith.addf %30, %32 : vector<8x8xf32>
    %34 = arith.negf %33 : vector<8x8xf32>
    %35 = math.exp %34 : vector<8x8xf32>
    %cst_15 = arith.constant 1.000000e+00 : f32
    %36 = vector.broadcast %cst_15 : f32 to vector<8x8xf32>
    %37 = arith.addf %36, %35 : vector<8x8xf32>
    %38 = arith.divf %36, %37 : vector<8x8xf32>
    %cst_16 = arith.constant 4.400000e+01 : f32
    %39 = vector.broadcast %cst_16 : f32 to vector<8x8xf32>
    %40 = arith.mulf %38, %39 : vector<8x8xf32>
    %cst_17 = arith.constant 1.000000e+00 : f32
    %41 = vector.broadcast %cst_17 : f32 to vector<8x8xf32>
    %42 = arith.addf %40, %41 : vector<8x8xf32>
    %c0_18 = arith.constant 0 : index
    %c0_19 = arith.constant 0 : index
    %43 = vector.load %arg7[%c0_18, %c0_19] : memref<8x8xf32, #tpu.memory_space<vmem>>, vector<8x8xf32>
    tpu.vector_store %arg7[%c0_18, %c0_19], %42 {strides = array<i32>} : memref<8x8xf32, #tpu.memory_space<vmem>>, vector<8x8xf32>,
    return
  }
  func.func @transform_0(%arg0: i32) -> (i32, i32) {
    %c0_i32 = arith.constant 0 : i32
    %c0_i32_0 = arith.constant 0 : i32
    return %arg0, %c0_i32 : i32, i32
  }
  func.func @transform_1(%arg0: i32) -> (i32, i32) {
    %c0_i32 = arith.constant 0 : i32
    %c0_i32_0 = arith.constant 0 : i32
    %c0_i32_1 = arith.constant 0 : i32
    return %c0_i32, %c0_i32_0 : i32, i32
  }
  func.func @transform_2(%arg0: i32) -> (i32, i32) {
    %c0_i32 = arith.constant 0 : i32
    %c0_i32_0 = arith.constant 0 : i32
    %c0_i32_1 = arith.constant 0 : i32
    return %c0_i32, %c0_i32_0 : i32, i32
  }
  func.func @transform_3(%arg0: i32) -> (i32, i32) {
    %c0_i32 = arith.constant 0 : i32
    %c0_i32_0 = arith.constant 0 : i32
    %c0_i32_1 = arith.constant 0 : i32
    return %c0_i32, %c0_i32_0 : i32, i32
  }
  func.func @transform_4(%arg0: i32) -> (i32, i32) {
    %c0_i32 = arith.constant 0 : i32
    %c0_i32_0 = arith.constant 0 : i32
    %c0_i32_1 = arith.constant 0 : i32
    return %c0_i32, %c0_i32_0 : i32, i32
  }
  func.func @transform_5(%arg0: i32) -> (i32, i32) {
    %c0_i32 = arith.constant 0 : i32
    %c0_i32_0 = arith.constant 0 : i32
    %c0_i32_1 = arith.constant 0 : i32
    return %c0_i32, %c0_i32_0 : i32, i32
  }
  func.func @transform_6(%arg0: i32) -> (i32, i32) {
    %c0_i32 = arith.constant 0 : i32
    %c0_i32_0 = arith.constant 0 : i32
    return %arg0, %c0_i32 : i32, i32
  }
}

</mosaic_0001>

<llo_original>
// kernel: tpu_custom_call.1
$region0: #{tpu_custom_call.1}
  #allocation0 [shape = 'u32[]', space=smem, size = 0x4, offset = 0x4, fixed_abs, tag = 'smem constant byte address 0x4 - core index']
  #allocation1 [shape = 'u32[144,128]{1,0:T(1,128)}', space=vmem, size = 0x12000, scoped, tag = 'internal scratch']
  %s0 = inlined_call_operand.vmem [shape: f32[8,16], index: 0, kind: input, shape index: {}]
  %s1 = inlined_call_operand.vmem [shape: bf16[16,384], index: 1, kind: input, shape index: {}]
  %s2 = inlined_call_operand.vmem [shape: f32[1,384], index: 2, kind: input, shape index: {}]
  %s3 = inlined_call_operand.vmem [shape: f32[1,128], index: 3, kind: input, shape index: {}]
  %s4 = inlined_call_operand.vmem [shape: bf16[128,8], index: 4, kind: input, shape index: {}]
  %s5 = inlined_call_operand.vmem [shape: f32[1,8], index: 5, kind: input, shape index: {}]
  %s6 = inlined_call_operand.hbm [shape: f32[8,8], index: 6, kind: output, shape index: {}]
  %s7 = sld [smem:[#allocation0]]
  $region34: #{tpu_custom_call.1} parent=0
    _
  %s9 = ssub.s32 1, %s7
  %s10 = scalar_select 0, %s9, %s7
  $region1: #{tpu_custom_call.1} parent=0
    #allocation2 [shape = 'u8[4096]{0}', space=vmem, size = 0x1000, scoped, tag = 'output window, operand 0, single buffered']
    #allocation3 [shape = 's32[1]{0}', space=sflag, size = 0x4, scoped, tag = 'scoped memory for tpu_custom_call.1']
    %11 = vsyncpa [#allocation3], 0
    // Predicated region
    $region2: #{tpu_custom_call.1} parent=1 // pred_check
      _
    $region3: #{tpu_custom_call.1} parent=1 // pred_check_branch
      %13 = sbr.rel (0) target = $region5
    $region4: #{tpu_custom_call.1} parent=1 // pred_region
      _
    $region5: #{tpu_custom_call.1} parent=1 // pred_fallthru
      _
    // Predicated region
    $region6: #{tpu_custom_call.1} parent=1 // pred_check
      _
    $region7: #{tpu_custom_call.1} parent=1 // pred_check_branch
      %15 = sbr.rel (0) target = $region9
    $region8: #{tpu_custom_call.1} parent=1 // pred_region
      _
    $region9: #{tpu_custom_call.1} parent=1 // pred_fallthru
      _
    // Predicated region
    $region10: #{tpu_custom_call.1} parent=1 // pred_check
      _
    $region11: #{tpu_custom_call.1} parent=1 // pred_check_branch
      %17 = sbr.rel (0) target = $region13
    $region12: #{tpu_custom_call.1} parent=1 // pred_region
      _
    $region13: #{tpu_custom_call.1} parent=1 // pred_fallthru
      _
    // Predicated region
    $region14: #{tpu_custom_call.1} parent=1 // pred_check
      _
    $region15: #{tpu_custom_call.1} parent=1 // pred_check_branch
      %19 = sbr.rel (0) target = $region17
    $region16: #{tpu_custom_call.1} parent=1 // pred_region
      _
    $region17: #{tpu_custom_call.1} parent=1 // pred_fallthru
      _
    // Predicated region
    $region18: #{tpu_custom_call.1} parent=1 // pred_check
      _
    $region19: #{tpu_custom_call.1} parent=1 // pred_check_branch
      %21 = sbr.rel (0) target = $region21
    $region20: #{tpu_custom_call.1} parent=1 // pred_region
      _
    $region21: #{tpu_custom_call.1} parent=1 // pred_fallthru
      _
    // Predicated region
    $region22: #{tpu_custom_call.1} parent=1 // pred_check
      _
    $region23: #{tpu_custom_call.1} parent=1 // pred_check_branch
      %23 = sbr.rel (0) target = $region25
    $region24: #{tpu_custom_call.1} parent=1 // pred_region
      _
    $region25: #{tpu_custom_call.1} parent=1 // pred_fallthru
      _
    %v25 = vld [vmem:[%s0] sm:$0xff]
    %v26 = vpack.c.bf16 %v25, %v25
    %v27 = vld [vmem:[%s1] sm:$0xff]
    %v28 = vld [vmem:[%s1 + $0x8] sm:$0xf]
    %v29 = vld [vmem:[%s1 + $0xc] sm:$0xff]
    %v30 = vld [vmem:[%s1 + $0x14] sm:$0xf]
    %v31 = vld [vmem:[%s2] sm:$0x7]
    %v33 = vlaneseq
    %v34 = vshrl.u32 %v33, 7
    %v35 = vsub.s32 0, %v34
    %v36 = vrot.slane %v31, %v35
    %v37 = vlaneseq
    %v38 = vshrl.u32 %v37, 7
    %v39 = vsub.s32 1, %v38
    %v40 = vrot.slane %v31, %v39
    %v41 = vlaneseq
    %v42 = vshrl.u32 %v41, 7
    %v43 = vsub.s32 2, %v42
    %v44 = vrot.slane %v31, %v43
    %v52 = vunpack.c.l.b16 %v27
    %v53 = vunpack.c.h.b16 %v27
    %v54 = vunpack.c.l.b16 %v28
    %v55 = vunpack.c.l.b16 %v29
    %v56 = vunpack.c.h.b16 %v29
    %v57 = vunpack.c.l.b16 %v30
    %v58 = vpack.c.b16 %v55, %v52
    %v59 = vpack.c.b16 %v56, %v53
    %v60 = vpack.c.b16 %v57, %v54
    %vm64 = vcmask 130048
    %v66 = vsel %vm64, %v26, 0
    %68 = vmatprep.subr.bf16.mxu0 %v59
    %69 = vmatpush1.bf16.msra.mxu0 %v58
    %70 = vmatprep.subr.bf16.mxu0 0
    %71 = vmatpush1.bf16.msra.mxu0 0
    %72 = vmatprep.subr.bf16.mxu0 0
    %73 = vmatpush1.bf16.msra.mxu0 0
    %74 = vmatprep.subr.bf16.mxu0 0
    %75 = vmatpush1.bf16.msra.mxu0 0
    %76 = vmatprep.subr.bf16.mxu0 0
    %77 = vmatpush1.bf16.msra.mxu0 0
    %78 = vmatprep.subr.bf16.mxu0 0
    %79 = vmatpush1.bf16.msra.mxu0 0
    %80 = vmatprep.subr.bf16.mxu0 0
    %81 = vmatpush1.bf16.msra.mxu0 0
    %82 = vmatprep.subr.bf16.mxu0 0
    %83 = vmatpush1.bf16.msra.mxu0 0
    %84 = vmatprep.subr.bf16.mxu0 0
    %85 = vmatpush1.bf16.msra.mxu0 0
    %86 = vmatprep.subr.bf16.mxu0 0
    %87 = vmatpush1.bf16.msra.mxu0 0
    %88 = vmatprep.subr.bf16.mxu0 0
    %89 = vmatpush1.bf16.msra.mxu0 0
    %90 = vmatprep.subr.bf16.mxu0 0
    %91 = vmatpush1.bf16.msra.mxu0 0
    %92 = vmatprep.subr.bf16.mxu0 0
    %93 = vmatpush1.bf16.msra.mxu0 0
    %94 = vmatprep.subr.bf16.mxu0 0
    %95 = vmatpush1.bf16.msra.mxu0 0
    %96 = vmatprep.subr.bf16.mxu0 0
    %97 = vmatpush1.bf16.msra.mxu0 0
    %98 = vmatprep.subr.bf16.mxu0 0
    %99 = vmatpush1.bf16.msra.mxu0 0
    %100 = vmatprep.mubr.bf16.mxu0 0
    %101 = vmatmul.mubr.bf16.gmra.mrb[0].mxu0 %v66
    %v102 = vpop.f32.mrb[0].mxu0
    %v103 = vadd.f32 %v36, %v102
    %v104 = vpop.f32.mrb[0].mxu0
    %v105 = vadd.f32 %v40, %v104
    %v106 = vpop.f32.mrb[0].mxu0
    %v107 = vpop.f32.mrb[0].mxu0
    %108 = vdwg.mxu0
    %109 = vmatprep.subr.bf16.mxu0 0
    %110 = vmatpush1.bf16.msra.mxu0 %v60
    %111 = vmatprep.subr.bf16.mxu0 0
    %112 = vmatpush1.bf16.msra.mxu0 0
    %113 = vmatprep.subr.bf16.mxu0 0
    %114 = vmatpush1.bf16.msra.mxu0 0
    %115 = vmatprep.subr.bf16.mxu0 0
    %116 = vmatpush1.bf16.msra.mxu0 0
    %117 = vmatprep.subr.bf16.mxu0 0
    %118 = vmatpush1.bf16.msra.mxu0 0
    %119 = vmatprep.subr.bf16.mxu0 0
    %120 = vmatpush1.bf16.msra.mxu0 0
    %121 = vmatprep.subr.bf16.mxu0 0
    %122 = vmatpush1.bf16.msra.mxu0 0
    %123 = vmatprep.subr.bf16.mxu0 0
    %124 = vmatpush1.bf16.msra.mxu0 0
    %125 = vmatprep.subr.bf16.mxu0 0
    %126 = vmatpush1.bf16.msra.mxu0 0
    %127 = vmatprep.subr.bf16.mxu0 0
    %128 = vmatpush1.bf16.msra.mxu0 0
    %129 = vmatprep.subr.bf16.mxu0 0
    %130 = vmatpush1.bf16.msra.mxu0 0
    %131 = vmatprep.subr.bf16.mxu0 0
    %132 = vmatpush1.bf16.msra.mxu0 0
    %133 = vmatprep.subr.bf16.mxu0 0
    %134 = vmatpush1.bf16.msra.mxu0 0
    %135 = vmatprep.subr.bf16.mxu0 0
    %136 = vmatpush1.bf16.msra.mxu0 0
    %137 = vmatprep.subr.bf16.mxu0 0
    %138 = vmatpush1.bf16.msra.mxu0 0
    %139 = vmatprep.subr.bf16.mxu0 0
    %140 = vmatpush1.bf16.msra.mxu0 0
    %141 = vmatprep.mubr.bf16.mxu0 0
    %142 = vmatmul.mubr.bf16.gmra.mrb[0].mxu0 %v66
    %v143 = vpop.f32.mrb[0].mxu0
    %v144 = vadd.f32 %v44, %v143
    %v145 = vpop.f32.mrb[0].mxu0
    %v146 = vpop.f32.mrb[0].mxu0
    %v147 = vpop.f32.mrb[0].mxu0
    %148 = vdwg.mxu0
    %v149 = vxor.u32 %v103, 2147483648
    %v150 = vmul.f32 %v149, 1.442695
    %v151 = vpow.pop %v150
    %v152 = vadd.f32 %v151, 1.0
    %v153 = vrcp.pop %v152
    %v154 = vmul.f32 1.0, %v153
    %v155 = vsub.f32 0.0, %v105
    %v156 = vxor.u32 %v155, 2147483648
    %v157 = vmul.f32 %v156, 1.442695
    %v158 = vpow.pop %v157
    %v159 = vadd.f32 %v158, 1.0
    %v160 = vrcp.pop %v159
    %v161 = vmul.f32 1.0, %v160
    %v162 = vld [vmem:[%s3] sm:$0x1]
    %v164 = vlaneseq
    %v165 = vshrl.u32 %v164, 7
    %v166 = vsub.s32 0, %v165
    %v167 = vrot.slane %v162, %v166
    %v169 = vmul.f32 %v154, %v167
    %v170 = vadd.f32 %v144, %v169
    %v171 = vtanh.pop %v170
    %v172 = vmul.f32 %v161, %v171
    %v173 = vpack.c.bf16 %v172, %v172
    %v174 = vld [vmem:[%s4] sm:$0xf]
    %v175 = vld [vmem:[%s4 + $0x4] sm:$0xf]
    %v176 = vld [vmem:[%s4 + $0x8] sm:$0xf]
    %v177 = vld [vmem:[%s4 + $0xc] sm:$0xf]
    %v178 = vld [vmem:[%s4 + $0x10] sm:$0xf]
    %v179 = vld [vmem:[%s4 + $0x14] sm:$0xf]
    %v180 = vld [vmem:[%s4 + $0x18] sm:$0xf]
    %v181 = vld [vmem:[%s4 + $0x1c] sm:$0xf]
    %v182 = vld [vmem:[%s4 + $0x20] sm:$0xf]
    %v183 = vld [vmem:[%s4 + $0x24] sm:$0xf]
    %v184 = vld [vmem:[%s4 + $0x28] sm:$0xf]
    %v185 = vld [vmem:[%s4 + $0x2c] sm:$0xf]
    %v186 = vld [vmem:[%s4 + $0x30] sm:$0xf]
    %v187 = vld [vmem:[%s4 + $0x34] sm:$0xf]
    %v188 = vld [vmem:[%s4 + $0x38] sm:$0xf]
    %v189 = vld [vmem:[%s4 + $0x3c] sm:$0xf]
    %v190 = vld [vmem:[%s5] sm:$0x1]
    %v192 = vlaneseq
    %v193 = vshrl.u32 %v192, 7
    %v194 = vsub.s32 0, %v193
    %v195 = vrot.slane %v190, %v194
    %v213 = vunpack.c.l.b16 %v174
    %v214 = vunpack.c.l.b16 %v175
    %v215 = vunpack.c.l.b16 %v176
    %v216 = vunpack.c.l.b16 %v177
    %v217 = vunpack.c.l.b16 %v178
    %v218 = vunpack.c.l.b16 %v179
    %v219 = vunpack.c.l.b16 %v180
    %v220 = vunpack.c.l.b16 %v181
    %v221 = vunpack.c.l.b16 %v182
    %v222 = vunpack.c.l.b16 %v183
    %v223 = vunpack.c.l.b16 %v184
    %v224 = vunpack.c.l.b16 %v185
    %v225 = vunpack.c.l.b16 %v186
    %v226 = vunpack.c.l.b16 %v187
    %v227 = vunpack.c.l.b16 %v188
    %v228 = vunpack.c.l.b16 %v189
    %v229 = vpack.c.b16 %v214, %v213
    %v230 = vpack.c.b16 %v216, %v215
    %v231 = vpack.c.b16 %v218, %v217
    %v232 = vpack.c.b16 %v220, %v219
    %v233 = vpack.c.b16 %v222, %v221
    %v234 = vpack.c.b16 %v224, %v223
    %v235 = vpack.c.b16 %v226, %v225
    %v236 = vpack.c.b16 %v228, %v227
    %245 = vmatprep.subr.bf16.mxu0 0
    %246 = vmatpush1.bf16.msra.mxu0 %v229
    %247 = vmatprep.subr.bf16.mxu0 0
    %248 = vmatpush1.bf16.msra.mxu0 %v230
    %249 = vmatprep.subr.bf16.mxu0 0
    %250 = vmatpush1.bf16.msra.mxu0 %v231
    %251 = vmatprep.subr.bf16.mxu0 0
    %252 = vmatpush1.bf16.msra.mxu0 %v232
    %253 = vmatprep.subr.bf16.mxu0 0
    %254 = vmatpush1.bf16.msra.mxu0 %v233
    %255 = vmatprep.subr.bf16.mxu0 0
    %256 = vmatpush1.bf16.msra.mxu0 %v234
    %257 = vmatprep.subr.bf16.mxu0 0
    %258 = vmatpush1.bf16.msra.mxu0 %v235
    %259 = vmatprep.subr.bf16.mxu0 0
    %260 = vmatpush1.bf16.msra.mxu0 %v236
    %261 = vmatprep.subr.bf16.mxu0 0
    %262 = vmatpush1.bf16.msra.mxu0 0
    %263 = vmatprep.subr.bf16.mxu0 0
    %264 = vmatpush1.bf16.msra.mxu0 0
    %265 = vmatprep.subr.bf16.mxu0 0
    %266 = vmatpush1.bf16.msra.mxu0 0
    %267 = vmatprep.subr.bf16.mxu0 0
    %268 = vmatpush1.bf16.msra.mxu0 0
    %269 = vmatprep.subr.bf16.mxu0 0
    %270 = vmatpush1.bf16.msra.mxu0 0
    %271 = vmatprep.subr.bf16.mxu0 0
    %272 = vmatpush1.bf16.msra.mxu0 0
    %273 = vmatprep.subr.bf16.mxu0 0
    %274 = vmatpush1.bf16.msra.mxu0 0
    %275 = vmatprep.subr.bf16.mxu0 0
    %276 = vmatpush1.bf16.msra.mxu0 0
    %277 = vmatprep.mubr.bf16.mxu0 0
    %278 = vmatmul.mubr.bf16.gmra.mrb[0].mxu0 %v173
    %v279 = vpop.f32.mrb[0].mxu0
    %v280 = vadd.f32 %v195, %v279
    %v281 = vpop.f32.mrb[0].mxu0
    %v282 = vpop.f32.mrb[0].mxu0
    %v283 = vpop.f32.mrb[0].mxu0
    %284 = vdwg.mxu0
    %v285 = vxor.u32 %v280, 2147483648
    %v286 = vmul.f32 %v285, 1.442695
    %v287 = vpow.pop %v286
    %v288 = vadd.f32 %v287, 1.0
    %v289 = vrcp.pop %v288
    %v290 = vmul.f32 1.0, %v289
    %v291 = vmul.f32 %v290, 44.0
    %v292 = vadd.f32 %v291, 1.0
    %vm293 = vcmask 64512
    %294 = vst.msk [vmem:[#allocation2] sm:$0xff] %vm293, %v292
    // Predicated region
    $region26: #{tpu_custom_call.1} parent=1 // pred_check
      _
    $region27: #{tpu_custom_call.1} parent=1 // pred_check_branch
      %296 = sbr.rel (0) target = $region29
    $region28: #{tpu_custom_call.1} parent=1 // pred_region
      %s298 = ssub.s32 128, 128
      %299 = vsyncadd [#allocation3], %s298
      %s301 = sshll.u32 [#allocation2], 4
      %s302 = int_to_ptr.vmem [resolvable:$true] %s301
      %304 = dma.vmem_to_hbm [thread:$0]  %s302, 128, %s6, [#allocation3]
    $region29: #{tpu_custom_call.1} parent=1 // pred_fallthru
      _
    // Predicated region
    $region30: #{tpu_custom_call.1} parent=1 // pred_check
      _
    $region31: #{tpu_custom_call.1} parent=1 // pred_check_branch
      %306 = sbr.rel (0) target = $region33
    $region32: #{tpu_custom_call.1} parent=1 // pred_region
      %307 = dma.done [#allocation3], 128
    $region33: #{tpu_custom_call.1} parent=1 // pred_fallthru
      _
    %308 = vsyncpa [#allocation3], 1

</llo_original>
